<compile_context>
chip_gen: v7x
topology: tpu7x:2x2x1
jax: 0.10.0
libtpu: 0.0.40
codegen_flags: <defaults>
</compile_context>

<pallas_src>
import jax
import jax.numpy as jnp
from jax.experimental import pallas as pl
from jax.experimental.pallas import tpu as pltpu

_SMOOTH = 1.0
_BLOCK_BUDGET_BYTES = 4 << 20      # per-input block; 2 inputs x 2 pipeline
_VMEM_LIMIT_BYTES = 48 << 20       # buffers ~= 16 MiB << 48 MiB scoped limit


def _dice_kernel(p_ref, t_ref, inter_ref, denom_ref):
    """Accumulate vreg-scale partial sums of p*t and p+t into the output refs.

    p_ref, t_ref         : VMEM (bn, br, lanes) blocks (channel 0 already
                           selected/squeezed by the BlockSpec).
    inter_ref, denom_ref : VMEM (acc_rows, lanes) f32 partials.  Their
                           index_map depends only on grid axis 0, so they stay
                           resident across the whole reduction axis (axis 1)
                           and act as accumulators; the final cross-lane
                           reduction happens once, in the wrapper.
    """
    j = pl.program_id(1)

    @pl.when(j == 0)
    def _():
        inter_ref[...] = jnp.zeros_like(inter_ref)
        denom_ref[...] = jnp.zeros_like(denom_ref)

    acc_rows, lanes = inter_ref.shape
    p = p_ref[...].astype(jnp.float32)
    t = t_ref[...].astype(jnp.float32)
    # Leading-axis sums only: vreg-wise VPU adds (no per-step XLU, no
    # full-block accumulator stores).  The reshape is a pure view: either
    # br % 8 == 0 (sublane-tile-aligned regroup) or it is the identity.
    inter_ref[...] += jnp.sum((p * t).reshape(-1, acc_rows, lanes), axis=0)
    denom_ref[...] += jnp.sum((p + t).reshape(-1, acc_rows, lanes), axis=0)


def _choose_blocks(n, rows, lanes, itemsize):
    """Pick (bn, br) honoring the VMEM budget *including* layout padding."""
    lanes_p = ((lanes + 127) // 128) * 128

    def blk_bytes(bn, br):
        return bn * (((br + 7) // 8) * 8) * lanes_p * itemsize

    # Case 1: a whole channel-0 plane fits -> pack batch items per block, but
    # keep at least two batch blocks (when N >= 2) so the "parallel" leading
    # grid axis has work for both v7x TensorCores.
    if blk_bytes(1, rows) <= _BLOCK_BUDGET_BYTES:
        bn = 1
        for d in range(max(n // 2, 1), 0, -1):
            if n % d == 0 and blk_bytes(d, rows) <= _BLOCK_BUDGET_BYTES:
                bn = d
                break
        return bn, rows

    # Case 2: one plane exceeds the budget -> tile along rows.  Only
    # multiple-of-8 divisors keep the (8,128) BlockSpec rule and sublane
    # alignment; pick the largest one that fits the (padded) budget.
    div8 = [d for d in range(8, rows + 1, 8) if rows % d == 0]
    for d in sorted(div8, reverse=True):
        if blk_bytes(1, d) <= _BLOCK_BUDGET_BYTES:
            return 1, d
    if div8:
        return 1, div8[0]   # smallest aligned divisor; may exceed the budget
    # TODO(synk): masked/cdiv remainder handling for `rows` with no
    # multiple-of-8 divisor; for now fall back to the whole plane (compiles,
    # may OOM VMEM only for pathological plane sizes).
    return 1, rows


def dice_loss(y_pred: jax.Array, y_true: jax.Array) -> jax.Array:
    """Pallas implementation of DiceLoss.forward (returns a scalar f32)."""
    assert y_pred.shape == y_true.shape
    assert y_pred.ndim == 4, "expected NCHW input"
    n, c, h, w = y_pred.shape

    # Lane-dense view of the spatial plane when W alone is not lane-aligned.
    if w % 128 == 0:
        rows, lanes = h, w
        p_view, t_view = y_pred, y_true
    elif (h * w) % 128 == 0:
        rows, lanes = (h * w) // 128, 128
        p_view = y_pred.reshape(n, c, rows, lanes)
        t_view = y_true.reshape(n, c, rows, lanes)
    else:
        rows, lanes = h, w          # lane-padded fallback (W not foldable)
        p_view, t_view = y_pred, y_true

    itemsize = max(jnp.dtype(y_pred.dtype).itemsize,
                   jnp.dtype(y_true.dtype).itemsize)
    bn, br = _choose_blocks(n, rows, lanes, itemsize)
    grid = (n // bn, rows // br)
    acc_rows = 8 if br % 8 == 0 else br

    total = n * h * w  # channel-0 elements actually touched
    cost = pl.CostEstimate(
        flops=4 * total,
        transcendentals=0,
        bytes_accessed=total * (jnp.dtype(y_pred.dtype).itemsize
                                + jnp.dtype(y_true.dtype).itemsize)
        + 2 * grid[0] * acc_rows * lanes * 4,
    )

    # Channel 0 is selected inside the BlockSpec: the channel dim is squeezed
    # (None) and its index_map entry pinned to 0, so only channel-0 bytes are
    # ever DMA'd -- no wrapper-side slice/cast pass.
    in_spec = pl.BlockSpec((bn, None, br, lanes), lambda i, j: (i, 0, j, 0))
    out_spec = pl.BlockSpec((None, acc_rows, lanes), lambda i, j: (i, 0, 0))

    inter_p, denom_p = pl.pallas_call(
        _dice_kernel,
        out_shape=(
            jax.ShapeDtypeStruct((grid[0], acc_rows, lanes), jnp.float32),
            jax.ShapeDtypeStruct((grid[0], acc_rows, lanes), jnp.float32),
        ),
        grid_spec=pltpu.PrefetchScalarGridSpec(
            num_scalar_prefetch=0,
            grid=grid,
            in_specs=[in_spec, in_spec],
            out_specs=[out_spec, out_spec],
        ),
        compiler_params=pltpu.CompilerParams(
            # batch-block axis shards across v7x's 2 TCs; reduction axis stays
            # sequential so the resident output accumulators are correct.
            dimension_semantics=("parallel", "arbitrary"),
            vmem_limit_bytes=_VMEM_LIMIT_BYTES,
        ),
        cost_estimate=cost,
    )(p_view, t_view)

    # Tiny final reduction + scalar math in the wrapper (once, not per step).
    inter = jnp.sum(inter_p)
    denom = jnp.sum(denom_p)
    return 1.0 - (2.0 * inter + _SMOOTH) / (denom + _SMOOTH)


def _dice_loss_ref(y_pred, y_true):
    p = y_pred[:, 0].reshape(-1).astype(jnp.float32)
    t = y_true[:, 0].reshape(-1).astype(jnp.float32)
    inter = jnp.sum(p * t)
    dsc = (2.0 * inter + _SMOOTH) / (jnp.sum(p) + jnp.sum(t) + _SMOOTH)
    return 1.0 - dsc


if __name__ == "__main__":
    key = jax.random.PRNGKey(0)
    k1, k2 = jax.random.split(key)
    # NCHW, same convention as the PyTorch module
    N, C, H, W = 2, 4, 16, 16
    y_pred = jax.random.uniform(k1, (N, C, H, W), dtype=jnp.float32)
    # binary-ish ground truth mask
    y_true = (jax.random.uniform(k2, (N, C, H, W)) > 0.5).astype(jnp.float32)

    loss = jax.block_until_ready(dice_loss(y_pred, y_true))
    ref = jax.block_until_ready(_dice_loss_ref(y_pred, y_true))

    assert jnp.allclose(loss, ref, rtol=1e-5, atol=1e-6), (loss, ref)
    print("KERNEL_OK")
</pallas_src>

<mosaic_0001>
module attributes {stable_mosaic.version = 11 : i64} {
  func.func @_dice_kernel(%arg0: i32, %arg1: i32, %arg2: memref<1x1x2x128xf32, #tpu.memory_space<vmem>>, %arg3: memref<1x1x2x128xf32, #tpu.memory_space<vmem>>, %arg4: memref<1x2x128xf32, #tpu.memory_space<vmem>>, %arg5: memref<1x2x128xf32, #tpu.memory_space<vmem>>) attributes {dimension_semantics = [#tpu.dimension_semantics<parallel>, #tpu.dimension_semantics<arbitrary>], iteration_bounds = array<i64: 2, 1>, scalar_prefetch = 0 : i64, scratch_operands = 0 : i64, tpu.core_type = #tpu.core_type<tc>, window_params = [{transform_indices = @transform_0, window_bounds = array<i64: 1, 1, 2, 128>}, {transform_indices = @transform_1, window_bounds = array<i64: 1, 1, 2, 128>}, {transform_indices = @transform_2, window_bounds = array<i64: 1, 2, 128>}, {transform_indices = @transform_3, window_bounds = array<i64: 1, 2, 128>}]} {
    %c0_i32 = arith.constant 0 : i32
    %0 = arith.cmpi eq, %arg1, %c0_i32 : i32
    %1 = arith.extui %0 : i1 to i32
    %c0_i32_0 = arith.constant 0 : i32
    %2 = arith.cmpi ne, %1, %c0_i32_0 : i32
    scf.if %2 {
      %cst_21 = arith.constant 0.000000e+00 : f32
      %23 = vector.broadcast %cst_21 : f32 to vector<2x128xf32>
      %c0_22 = arith.constant 0 : index
      %c0_23 = arith.constant 0 : index
      %c0_24 = arith.constant 0 : index
      %24 = vector.load %arg4[%c0_22, %c0_23, %c0_24] : memref<1x2x128xf32, #tpu.memory_space<vmem>>, vector<1x2x128xf32>
      %25 = vector.shape_cast %24 : vector<1x2x128xf32> to vector<2x128xf32>
      %26 = vector.shape_cast %23 : vector<2x128xf32> to vector<1x2x128xf32>
      tpu.vector_store %arg4[%c0_22, %c0_23, %c0_24], %26 {strides = array<i32>} : memref<1x2x128xf32, #tpu.memory_space<vmem>>, vector<1x2x128xf32>,
      %cst_25 = arith.constant 0.000000e+00 : f32
      %27 = vector.broadcast %cst_25 : f32 to vector<2x128xf32>
      %c0_26 = arith.constant 0 : index
      %c0_27 = arith.constant 0 : index
      %c0_28 = arith.constant 0 : index
      %28 = vector.load %arg5[%c0_26, %c0_27, %c0_28] : memref<1x2x128xf32, #tpu.memory_space<vmem>>, vector<1x2x128xf32>
      %29 = vector.shape_cast %28 : vector<1x2x128xf32> to vector<2x128xf32>
      %30 = vector.shape_cast %27 : vector<2x128xf32> to vector<1x2x128xf32>
      tpu.vector_store %arg5[%c0_26, %c0_27, %c0_28], %30 {strides = array<i32>} : memref<1x2x128xf32, #tpu.memory_space<vmem>>, vector<1x2x128xf32>,
    } else {
    }
    %c0 = arith.constant 0 : index
    %c0_1 = arith.constant 0 : index
    %c0_2 = arith.constant 0 : index
    %c0_3 = arith.constant 0 : index
    %3 = vector.load %arg2[%c0, %c0_1, %c0_2, %c0_3] : memref<1x1x2x128xf32, #tpu.memory_space<vmem>>, vector<1x1x2x128xf32>
    %4 = vector.shape_cast %3 : vector<1x1x2x128xf32> to vector<1x2x128xf32>
    %c0_4 = arith.constant 0 : index
    %c0_5 = arith.constant 0 : index
    %c0_6 = arith.constant 0 : index
    %c0_7 = arith.constant 0 : index
    %5 = vector.load %arg3[%c0_4, %c0_5, %c0_6, %c0_7] : memref<1x1x2x128xf32, #tpu.memory_space<vmem>>, vector<1x1x2x128xf32>
    %6 = vector.shape_cast %5 : vector<1x1x2x128xf32> to vector<1x2x128xf32>
    %c0_8 = arith.constant 0 : index
    %c0_9 = arith.constant 0 : index
    %c0_10 = arith.constant 0 : index
    %7 = vector.load %arg4[%c0_8, %c0_9, %c0_10] : memref<1x2x128xf32, #tpu.memory_space<vmem>>, vector<1x2x128xf32>
    %8 = vector.shape_cast %7 : vector<1x2x128xf32> to vector<2x128xf32>
    %9 = arith.mulf %4, %6 : vector<1x2x128xf32>
    %cst = arith.constant dense<0.000000e+00> : vector<2x128xf32>
    %10 = vector.multi_reduction <add>, %9, %cst [0] : vector<1x2x128xf32> to vector<2x128xf32>
    %11 = arith.addf %8, %10 : vector<2x128xf32>
    %c0_11 = arith.constant 0 : index
    %c0_12 = arith.constant 0 : index
    %c0_13 = arith.constant 0 : index
    %12 = vector.load %arg4[%c0_11, %c0_12, %c0_13] : memref<1x2x128xf32, #tpu.memory_space<vmem>>, vector<1x2x128xf32>
    %13 = vector.shape_cast %12 : vector<1x2x128xf32> to vector<2x128xf32>
    %14 = vector.shape_cast %11 : vector<2x128xf32> to vector<1x2x128xf32>
    tpu.vector_store %arg4[%c0_11, %c0_12, %c0_13], %14 {strides = array<i32>} : memref<1x2x128xf32, #tpu.memory_space<vmem>>, vector<1x2x128xf32>,
    %c0_14 = arith.constant 0 : index
    %c0_15 = arith.constant 0 : index
    %c0_16 = arith.constant 0 : index
    %15 = vector.load %arg5[%c0_14, %c0_15, %c0_16] : memref<1x2x128xf32, #tpu.memory_space<vmem>>, vector<1x2x128xf32>
    %16 = vector.shape_cast %15 : vector<1x2x128xf32> to vector<2x128xf32>
    %17 = arith.addf %4, %6 : vector<1x2x128xf32>
    %cst_17 = arith.constant dense<0.000000e+00> : vector<2x128xf32>
    %18 = vector.multi_reduction <add>, %17, %cst_17 [0] : vector<1x2x128xf32> to vector<2x128xf32>
    %19 = arith.addf %16, %18 : vector<2x128xf32>
    %c0_18 = arith.constant 0 : index
    %c0_19 = arith.constant 0 : index
    %c0_20 = arith.constant 0 : index
    %20 = vector.load %arg5[%c0_18, %c0_19, %c0_20] : memref<1x2x128xf32, #tpu.memory_space<vmem>>, vector<1x2x128xf32>
    %21 = vector.shape_cast %20 : vector<1x2x128xf32> to vector<2x128xf32>
    %22 = vector.shape_cast %19 : vector<2x128xf32> to vector<1x2x128xf32>
    tpu.vector_store %arg5[%c0_18, %c0_19, %c0_20], %22 {strides = array<i32>} : memref<1x2x128xf32, #tpu.memory_space<vmem>>, vector<1x2x128xf32>,
    return
  }
  func.func @transform_0(%arg0: i32, %arg1: i32) -> (i32, i32, i32, i32) {
    %c0_i32 = arith.constant 0 : i32
    %c0_i32_0 = arith.constant 0 : i32
    %c0_i32_1 = arith.constant 0 : i32
    return %arg0, %c0_i32, %arg1, %c0_i32_0 : i32, i32, i32, i32
  }
  func.func @transform_1(%arg0: i32, %arg1: i32) -> (i32, i32, i32, i32) {
    %c0_i32 = arith.constant 0 : i32
    %c0_i32_0 = arith.constant 0 : i32
    %c0_i32_1 = arith.constant 0 : i32
    return %arg0, %c0_i32, %arg1, %c0_i32_0 : i32, i32, i32, i32
  }
  func.func @transform_2(%arg0: i32, %arg1: i32) -> (i32, i32, i32) {
    %c0_i32 = arith.constant 0 : i32
    %c0_i32_0 = arith.constant 0 : i32
    %c0_i32_1 = arith.constant 0 : i32
    return %arg0, %c0_i32, %c0_i32_0 : i32, i32, i32
  }
  func.func @transform_3(%arg0: i32, %arg1: i32) -> (i32, i32, i32) {
    %c0_i32 = arith.constant 0 : i32
    %c0_i32_0 = arith.constant 0 : i32
    %c0_i32_1 = arith.constant 0 : i32
    return %arg0, %c0_i32, %c0_i32_0 : i32, i32, i32
  }
}

</mosaic_0001>

<llo_original>
// kernel: tpu_custom_call.1
$region0: #{tpu_custom_call.1}
  #allocation0 [shape = 'u32[]', space=smem, size = 0x4, offset = 0x4, fixed_abs, tag = 'smem constant byte address 0x4 - core index']
  #allocation1 [shape = 'u32[144,128]{1,0:T(1,128)}', space=vmem, size = 0x12000, scoped, tag = 'internal scratch']
  %s0 = inlined_call_operand.hbm [shape: f32[2,4,2,128], index: 0, kind: input, shape index: {}]
  %s1 = inlined_call_operand.hbm [shape: f32[2,4,2,128], index: 1, kind: input, shape index: {}]
  %s2 = inlined_call_operand.hbm [shape: f32[2,2,128], index: 2, kind: output, shape index: {0}]
  %s3 = inlined_call_operand.hbm [shape: f32[2,2,128], index: 3, kind: output, shape index: {1}]
  %4 = xla_tuple %s2, %s3
  %s5 = sld [smem:[#allocation0]]
  $region61: #{tpu_custom_call.1} parent=0
    _
  %s7 = ssub.s32 1, %s5
  %s8 = scalar_select 0, %s7, %s5
  $region1: #{tpu_custom_call.1} parent=0
    #allocation2 [shape = 'u8[2048]{0}', space=vmem, size = 0x800, scoped, tag = 'input window, operand 0']
    #allocation3 [shape = 's32[2]{0}', space=sflag, size = 0x8, scoped, tag = 'scoped memory for tpu_custom_call.1']
    #allocation4 [shape = 's32[2]{0}', space=sflag, size = 0x8, scoped, tag = 'scoped memory for tpu_custom_call.1']
    #allocation5 [shape = 'u8[2048]{0}', space=vmem, size = 0x800, scoped, tag = 'input window, operand 1']
    #allocation6 [shape = 's32[2]{0}', space=sflag, size = 0x8, scoped, tag = 'scoped memory for tpu_custom_call.1']
    #allocation7 [shape = 'u8[2048]{0}', space=vmem, size = 0x800, scoped, tag = 'output window, operand 0']
    #allocation8 [shape = 'u8[2048]{0}', space=vmem, size = 0x800, scoped, tag = 'output window, operand 1']
    #allocation9 [shape = 's32[2]{0}', space=sflag, size = 0x8, scoped, tag = 'scoped memory for tpu_custom_call.1']
    %9 = vsyncpa [#allocation3], 0
    %s10 = scalar_lea.sflag [#allocation3], 1
    %11 = vsyncpa %s10, 0
    %12 = vsyncpa [#allocation6], 0
    %s13 = scalar_lea.sflag [#allocation6], 1
    %14 = vsyncpa %s13, 0
    %15 = vsyncpa [#allocation4], 0
    %s16 = scalar_lea.sflag [#allocation4], 1
    %17 = vsyncpa %s16, 0
    %18 = vsyncpa [#allocation9], 0
    %s19 = scalar_lea.sflag [#allocation9], 1
    %20 = vsyncpa %s19, 0
    loop: start=0, step=1, limit=4
    $region2: #{tpu_custom_call.1} parent=1 // loop_pre_header
      _
    $region3: #{tpu_custom_call.1} parent=1 // loop_header
      %s22 = sphi 0, %s26
      %p23 = scmp.ge.s32.totalorder %s22, 4
      %s29 = sphi 0, %s41
      %s30 = sphi 0, %s37
      %s31 = sphi 0, %s29
      %s32 = sphi 0, %s30
      %s33 = sphi 0, %s31
      %s34 = sphi 0, %s32
      %s46 = sphi 0, %s48
      %s49 = sphi 0, %s46
      %s50 = sphi 0, %s49
      %s66 = sphi 0, %s50
      %s74 = sphi 0, %s76
      %s77 = sphi 0, %s74
      %s78 = sphi 0, %s77
      %s94 = sphi 0, %s78
      %s100 = sphi 0, %s102
      %s103 = sphi 0, %s100
      %s104 = sphi 0, %s103
      %s120 = sphi 0, %s104
      %s126 = sphi 0, %s128
      %s129 = sphi 0, %s126
      %s130 = sphi 0, %s129
      %s146 = sphi 0, %s130
    $region4: #{tpu_custom_call.1} parent=1 // loop_header_branch
      %25 = sbr.rel (%p23) target = $region8
    $region5: #{tpu_custom_call.1} parent=1 // loop_body
      %s27 = ssub.s32 %s22, 1
      %s28 = ssub.s32 %s22, 2
      %s35 = sadd.s32 1, %s30
      %p36 = scmp.ge.s32.totalorder %s35, 1
      %s37 = scalar_select %p36, 0, %s35
      %s38 = sadd.s32 1, %s29
      %s39 = scalar_select %p36, %s38, %s29
      %p40 = scmp.ge.s32.totalorder %s39, 2
      %s41 = scalar_select %p40, 0, %s39
      %s42 = ssub.s32 %s29, %s41
      %s43 = ssub.s32 %s30, %s37
      %s44 = sor.u32 %s42, %s43
      %p45 = scmp.eq.s32.totalorder %s44, 0
      %s47 = sadd.s32 %s46, 1
      %s48 = scalar_select %p45, %s46, %s47
      %p51 = pneg %p45
      %p52 = scmp.eq.s32.totalorder %s22, 1
      %p53 = por %p51, %p52
      %p54 = scmp.ne.s32.totalorder %s46, %s49
      %p55 = scmp.eq.s32.totalorder %s22, 0
      %p56 = por %p54, %p55
      %p57 = scmp.ne.s32.totalorder %s46, %s49
      %p58 = scmp.eq.s32.totalorder %s27, 1
      %p59 = por %p57, %p58
      %p60 = scmp.ne.s32.totalorder %s49, %s50
      %p61 = scmp.eq.s32.totalorder %s27, 0
      %p62 = por %p60, %p61
      %p63 = scmp.ne.s32.totalorder %s49, %s50
      %p64 = scmp.eq.s32.totalorder %s28, 1
      %p65 = por %p63, %p64
      %p67 = scmp.ne.s32.totalorder %s50, %s66
      %p68 = scmp.eq.s32.totalorder %s28, 0
      %p69 = por %p67, %p68
      %s70 = ssub.s32 %s29, %s41
      %s71 = ssub.s32 %s30, %s37
      %s72 = sor.u32 %s70, %s71
      %p73 = scmp.eq.s32.totalorder %s72, 0
      %s75 = sadd.s32 %s74, 1
      %s76 = scalar_select %p73, %s74, %s75
      %p79 = pneg %p73
      %p80 = scmp.eq.s32.totalorder %s22, 1
      %p81 = por %p79, %p80
      %p82 = scmp.ne.s32.totalorder %s74, %s77
      %p83 = scmp.eq.s32.totalorder %s22, 0
      %p84 = por %p82, %p83
      %p85 = scmp.ne.s32.totalorder %s74, %s77
      %p86 = scmp.eq.s32.totalorder %s27, 1
      %p87 = por %p85, %p86
      %p88 = scmp.ne.s32.totalorder %s77, %s78
      %p89 = scmp.eq.s32.totalorder %s27, 0
      %p90 = por %p88, %p89
      %p91 = scmp.ne.s32.totalorder %s77, %s78
      %p92 = scmp.eq.s32.totalorder %s28, 1
      %p93 = por %p91, %p92
      %p95 = scmp.ne.s32.totalorder %s78, %s94
      %p96 = scmp.eq.s32.totalorder %s28, 0
      %p97 = por %p95, %p96
      %s98 = ssub.s32 %s29, %s41
      %p99 = scmp.eq.s32.totalorder %s98, 0
      %s101 = sadd.s32 %s100, 1
      %s102 = scalar_select %p99, %s100, %s101
      %p105 = pneg %p99
      %p106 = scmp.eq.s32.totalorder %s22, 1
      %p107 = por %p105, %p106
      %p108 = scmp.ne.s32.totalorder %s100, %s103
      %p109 = scmp.eq.s32.totalorder %s22, 0
      %p110 = por %p108, %p109
      %p111 = scmp.ne.s32.totalorder %s100, %s103
      %p112 = scmp.eq.s32.totalorder %s27, 1
      %p113 = por %p111, %p112
      %p114 = scmp.ne.s32.totalorder %s103, %s104
      %p115 = scmp.eq.s32.totalorder %s27, 0
      %p116 = por %p114, %p115
      %p117 = scmp.ne.s32.totalorder %s103, %s104
      %p118 = scmp.eq.s32.totalorder %s28, 1
      %p119 = por %p117, %p118
      %p121 = scmp.ne.s32.totalorder %s104, %s120
      %p122 = scmp.eq.s32.totalorder %s28, 0
      %p123 = por %p121, %p122
      %s124 = ssub.s32 %s29, %s41
      %p125 = scmp.eq.s32.totalorder %s124, 0
      %s127 = sadd.s32 %s126, 1
      %s128 = scalar_select %p125, %s126, %s127
      %p131 = pneg %p125
      %p132 = scmp.eq.s32.totalorder %s22, 1
      %p133 = por %p131, %p132
      %p134 = scmp.ne.s32.totalorder %s126, %s129
      %p135 = scmp.eq.s32.totalorder %s22, 0
      %p136 = por %p134, %p135
      %p137 = scmp.ne.s32.totalorder %s126, %s129
      %p138 = scmp.eq.s32.totalorder %s27, 1
      %p139 = por %p137, %p138
      %p140 = scmp.ne.s32.totalorder %s129, %s130
      %p141 = scmp.eq.s32.totalorder %s27, 0
      %p142 = por %p140, %p141
      %p143 = scmp.ne.s32.totalorder %s129, %s130
      %p144 = scmp.eq.s32.totalorder %s28, 1
      %p145 = por %p143, %p144
      %p147 = scmp.ne.s32.totalorder %s130, %s146
      %p148 = scmp.eq.s32.totalorder %s28, 0
      %p149 = por %p147, %p148
      %p150 = scmp.le.s32.totalorder 1, %s22
      %p151 = scmp.lt.s32.totalorder %s22, 3
      %p152 = pnand %p150, %p151
      %p153 = pneg %p152
      // Predicated region
      $region9: #{tpu_custom_call.1} parent=5 // pred_check
        _
      $region10: #{tpu_custom_call.1} parent=5 // pred_check_branch
        %155 = sbr.rel (%p152) target = $region12
      $region11: #{tpu_custom_call.1} parent=5 // pred_region
        %s156 = ssub.s32 %s22, 1
      $region12: #{tpu_custom_call.1} parent=5 // pred_fallthru
        _
      %p157 = scmp.lt.s32.totalorder %s22, 2
      // Predicated region
      $region13: #{tpu_custom_call.1} parent=5 // pred_check
        %p158 = pneg %p157
      $region14: #{tpu_custom_call.1} parent=5 // pred_check_branch
        %160 = sbr.rel (%p158) target = $region16
      $region15: #{tpu_custom_call.1} parent=5 // pred_region
        // Predicated region
        $region17: #{tpu_custom_call.1} parent=15 // pred_check
          %p161 = pneg %p56
        $region18: #{tpu_custom_call.1} parent=15 // pred_check_branch
          %163 = sbr.rel (%p161) target = $region20
        $region19: #{tpu_custom_call.1} parent=15 // pred_region
          %s164 = sand.u32 %s46, 1
          %s165 = scalar_lea.sflag [#allocation3], %s164
          %s166 = sand.u32 %s46, 1
          %s167 = smul.addr %s166, 2
          %s168 = scalar_lea.vmem [#allocation2], %s167
          %s170 = ssub.s32 32, 32
          %171 = vsyncadd %s165, %s170
          %s172 = smul.addr %s29, 4
          %s173 = sadd.s32 %s30, %s172
          %s174 = smul.addr %s173, 32
          %s175 = scalar_lea.hbm %s0, %s174
          %s177 = sshll.u32 %s168, 4
          %s178 = int_to_ptr.vmem [resolvable:$true] %s177
          %180 = dma.hbm_to_vmem [thread:$0]  %s175, 32, %s178, %s165
        $region20: #{tpu_custom_call.1} parent=15 // pred_fallthru
          _
        // Predicated region
        $region21: #{tpu_custom_call.1} parent=15 // pred_check
          %p181 = pneg %p84
        $region22: #{tpu_custom_call.1} parent=15 // pred_check_branch
          %183 = sbr.rel (%p181) target = $region24
        $region23: #{tpu_custom_call.1} parent=15 // pred_region
          %s184 = sand.u32 %s74, 1
          %s185 = scalar_lea.sflag [#allocation6], %s184
          %s186 = sand.u32 %s74, 1
          %s187 = smul.addr %s186, 2
          %s188 = scalar_lea.vmem [#allocation5], %s187
          %s190 = ssub.s32 32, 32
          %191 = vsyncadd %s185, %s190
          %s192 = smul.addr %s29, 4
          %s193 = sadd.s32 %s30, %s192
          %s194 = smul.addr %s193, 32
          %s195 = scalar_lea.hbm %s1, %s194
          %s197 = sshll.u32 %s188, 4
          %s198 = int_to_ptr.vmem [resolvable:$true] %s197
          %200 = dma.hbm_to_vmem [thread:$0]  %s195, 32, %s198, %s185
        $region24: #{tpu_custom_call.1} parent=15 // pred_fallthru
          _
      $region16: #{tpu_custom_call.1} parent=5 // pred_fallthru
        _
      %p201 = scmp.le.s32.totalorder 1, %s22
      %p202 = scmp.lt.s32.totalorder %s22, 3
      %p203 = pnand %p201, %p202
      %p204 = pneg %p203
      // Predicated region
      $region25: #{tpu_custom_call.1} parent=5 // pred_check
        _
      $region26: #{tpu_custom_call.1} parent=5 // pred_check_branch
        %206 = sbr.rel (%p203) target = $region28
      $region27: #{tpu_custom_call.1} parent=5 // pred_region
        %s207 = ssub.s32 %s22, 1
        %s208 = sand.u32 %s49, 1
        %s209 = scalar_lea.sflag [#allocation3], %s208
        %s210 = sand.u32 %s49, 1
        %s211 = smul.addr %s210, 2
        %s212 = scalar_lea.vmem [#allocation2], %s211
        // Predicated region
        $region29: #{tpu_custom_call.1} parent=27 // pred_check
          %p213 = pneg %p62
        $region30: #{tpu_custom_call.1} parent=27 // pred_check_branch
          %215 = sbr.rel (%p213) target = $region32
        $region31: #{tpu_custom_call.1} parent=27 // pred_region
          %216 = dma.done %s209, 32
        $region32: #{tpu_custom_call.1} parent=27 // pred_fallthru
          _
        %s217 = sand.u32 %s77, 1
        %s218 = scalar_lea.sflag [#allocation6], %s217
        %s219 = sand.u32 %s77, 1
        %s220 = smul.addr %s219, 2
        %s221 = scalar_lea.vmem [#allocation5], %s220
        // Predicated region
        $region33: #{tpu_custom_call.1} parent=27 // pred_check
          %p222 = pneg %p90
        $region34: #{tpu_custom_call.1} parent=27 // pred_check_branch
          %224 = sbr.rel (%p222) target = $region36
        $region35: #{tpu_custom_call.1} parent=27 // pred_region
          %225 = dma.done %s218, 32
        $region36: #{tpu_custom_call.1} parent=27 // pred_fallthru
          _
        %s226 = sand.u32 %s49, 1
        %s227 = scalar_lea.sflag [#allocation3], %s226
        %s228 = sand.u32 %s49, 1
        %s229 = smul.addr %s228, 2
        %s230 = scalar_lea.vmem [#allocation2], %s229
        %p231 = pneg %p62
        %p232 = pneg %p59
        %s233 = sand.u32 %s77, 1
        %s234 = scalar_lea.sflag [#allocation6], %s233
        %s235 = sand.u32 %s77, 1
        %s236 = smul.addr %s235, 2
        %s237 = scalar_lea.vmem [#allocation5], %s236
        %p238 = pneg %p90
        %p239 = pneg %p87
        %p240 = pneg %p116
        %p241 = pneg %p113
        %s242 = sand.u32 %s103, 1
        %s243 = scalar_lea.sflag [#allocation4], %s242
        %s244 = sand.u32 %s103, 1
        %s245 = smul.addr %s244, 2
        %s246 = scalar_lea.vmem [#allocation7], %s245
        %p247 = pneg %p142
        %p248 = pneg %p139
        %s249 = sand.u32 %s129, 1
        %s250 = scalar_lea.sflag [#allocation9], %s249
        %s251 = sand.u32 %s129, 1
        %s252 = smul.addr %s251, 2
        %s253 = scalar_lea.vmem [#allocation8], %s252
        %p254 = scmp.eq.s32.totalorder %s32, 0
        // Predicated region
        $region37: #{tpu_custom_call.1} parent=27 // pred_check
          %p255 = pneg %p254
        $region38: #{tpu_custom_call.1} parent=27 // pred_check_branch
          %257 = sbr.rel (%p255) target = $region40
        $region39: #{tpu_custom_call.1} parent=27 // pred_region
          %258 = vst [vmem:[%s246] sm:$0x3] 0.0
          %259 = vst [vmem:[%s253] sm:$0x3] 0.0
        $region40: #{tpu_custom_call.1} parent=27 // pred_fallthru
          _
        %v260 = vld [vmem:[%s212] sm:$0x3]
        %v261 = vld [vmem:[%s221] sm:$0x3]
        %v262 = vld [vmem:[%s246] sm:$0x3]
        %v263 = vmul.f32 %v260, %v261
        %v264 = vadd.f32 %v263, 0.0
        %v265 = vadd.f32 %v262, %v264
        %266 = vst [vmem:[%s246] sm:$0x3] %v265
        %v267 = vld [vmem:[%s253] sm:$0x3]
        %v268 = vadd.f32 %v260, %v261
        %v269 = vadd.f32 %v268, 0.0
        %v270 = vadd.f32 %v267, %v269
        %271 = vst [vmem:[%s253] sm:$0x3] %v270
        %s272 = sand.u32 %s103, 1
        %s273 = scalar_lea.sflag [#allocation4], %s272
        %s274 = sand.u32 %s103, 1
        %s275 = smul.addr %s274, 2
        %s276 = scalar_lea.vmem [#allocation7], %s275
        %s277 = sand.u32 %s129, 1
        %s278 = scalar_lea.sflag [#allocation9], %s277
        %s279 = sand.u32 %s129, 1
        %s280 = smul.addr %s279, 2
        %s281 = scalar_lea.vmem [#allocation8], %s280
        // Predicated region
        $region41: #{tpu_custom_call.1} parent=27 // pred_check
          %p282 = pneg %p113
        $region42: #{tpu_custom_call.1} parent=27 // pred_check_branch
          %284 = sbr.rel (%p282) target = $region44
        $region43: #{tpu_custom_call.1} parent=27 // pred_region
          %s286 = ssub.s32 32, 32
          %287 = vsyncadd %s273, %s286
          %s288 = smul.addr %s31, 32
          %s289 = scalar_lea.hbm %s2, %s288
          %s291 = sshll.u32 %s276, 4
          %s292 = int_to_ptr.vmem [resolvable:$true] %s291
          %294 = dma.vmem_to_hbm [thread:$0]  %s292, 32, %s289, %s273
        $region44: #{tpu_custom_call.1} parent=27 // pred_fallthru
          _
        // Predicated region
        $region45: #{tpu_custom_call.1} parent=27 // pred_check
          %p295 = pneg %p139
        $region46: #{tpu_custom_call.1} parent=27 // pred_check_branch
          %297 = sbr.rel (%p295) target = $region48
        $region47: #{tpu_custom_call.1} parent=27 // pred_region
          %s299 = ssub.s32 32, 32
          %300 = vsyncadd %s278, %s299
          %s301 = smul.addr %s31, 32
          %s302 = scalar_lea.hbm %s3, %s301
          %s304 = sshll.u32 %s281, 4
          %s305 = int_to_ptr.vmem [resolvable:$true] %s304
          %307 = dma.vmem_to_hbm [thread:$0]  %s305, 32, %s302, %s278
        $region48: #{tpu_custom_call.1} parent=27 // pred_fallthru
          _
      $region28: #{tpu_custom_call.1} parent=5 // pred_fallthru
        _
      %p308 = scmp.le.s32.totalorder 2, %s22
      // Predicated region
      $region49: #{tpu_custom_call.1} parent=5 // pred_check
        %p309 = pneg %p308
      $region50: #{tpu_custom_call.1} parent=5 // pred_check_branch
        %311 = sbr.rel (%p309) target = $region52
      $region51: #{tpu_custom_call.1} parent=5 // pred_region
        %s312 = ssub.s32 %s22, 2
        // Predicated region
        $region53: #{tpu_custom_call.1} parent=51 // pred_check
          %p313 = pneg %p119
        $region54: #{tpu_custom_call.1} parent=51 // pred_check_branch
          %315 = sbr.rel (%p313) target = $region56
        $region55: #{tpu_custom_call.1} parent=51 // pred_region
          %s316 = sand.u32 %s104, 1
          %s317 = scalar_lea.sflag [#allocation4], %s316
          %s318 = sand.u32 %s104, 1
          %s319 = smul.addr %s318, 2
          %s320 = scalar_lea.vmem [#allocation7], %s319
          %321 = dma.done %s317, 32
        $region56: #{tpu_custom_call.1} parent=51 // pred_fallthru
          _
        // Predicated region
        $region57: #{tpu_custom_call.1} parent=51 // pred_check
          %p322 = pneg %p145
        $region58: #{tpu_custom_call.1} parent=51 // pred_check_branch
          %324 = sbr.rel (%p322) target = $region60
        $region59: #{tpu_custom_call.1} parent=51 // pred_region
          %s325 = sand.u32 %s130, 1
          %s326 = scalar_lea.sflag [#allocation9], %s325
          %s327 = sand.u32 %s130, 1
          %s328 = smul.addr %s327, 2
          %s329 = scalar_lea.vmem [#allocation8], %s328
          %330 = dma.done %s326, 32
        $region60: #{tpu_custom_call.1} parent=51 // pred_fallthru
          _
      $region52: #{tpu_custom_call.1} parent=5 // pred_fallthru
        _
    $region6: #{tpu_custom_call.1} parent=1 // loop_footer
      %s26 = sadd.s32 1, %s22
    $region7: #{tpu_custom_call.1} parent=1 // loop_footer_branch
      %21 = sbr.rel target = $region3
    $region8: #{tpu_custom_call.1} parent=1 // loop_exit
      _
    %331 = vsyncpa [#allocation3], 1
    %s332 = scalar_lea.sflag [#allocation3], 1
    %333 = vsyncpa %s332, 1
    %334 = vsyncpa [#allocation6], 1
    %s335 = scalar_lea.sflag [#allocation6], 1
    %336 = vsyncpa %s335, 1
    %337 = vsyncpa [#allocation4], 1
    %s338 = scalar_lea.sflag [#allocation4], 1
    %339 = vsyncpa %s338, 1
    %340 = vsyncpa [#allocation9], 1
    %s341 = scalar_lea.sflag [#allocation9], 1
    %342 = vsyncpa %s341, 1

</llo_original>
